<compile_context>
chip_gen: v6e
topology: v6e:2x2x1
jax: 0.10.0
libtpu: 0.0.40
codegen_flags: <defaults>
</compile_context>

<pallas_src>
import jax
import jax.numpy as jnp
from jax import lax
from jax.experimental import pallas as pl
from jax.experimental.pallas import tpu as pltpu


# ---------------------------------------------------------------- kernels ---

def _sru_feedback_kernel(w_ref, f_ref, u_ref, o_ref, c_ref):
    t = pl.program_id(1)          # time-block index (batch blocks are axis 0)

    @pl.when(t == 0)
    def _():
        c_ref[...] = jnp.zeros_like(c_ref)

    tb, n_sub, d = f_ref.shape
    # Hoist the (1, D) -> (TB, D) broadcast of W_fc out of the serial loop:
    # one cheap cross-sublane broadcast per grid step, not per sub-step.
    w = jnp.broadcast_to(w_ref[...], (tb, d))
    c = c_ref[...]                # (TB, D) f32 carry

    # Static unroll over the time block.  Each sub-step reads its (TB, D)
    # slice straight from the VMEM Ref (strided vld) instead of materializing
    # the whole (TB, Tt, D) block in vregs; per-step temporaries die at the
    # o_ref store, so vreg pressure is bounded even for Tt = 64.
    # TODO(synk): move to lax.fori_loop once dynamic sublane-dim Ref indexing
    # is guaranteed to lower on all targeted chips; static slices are the
    # safe, zero-cost choice here.
    for i in range(n_sub):
        f_i = f_ref[:, i, :].astype(jnp.float32)
        u_i = u_ref[:, i, :].astype(jnp.float32)
        gate = jax.nn.sigmoid(f_i + w * c)
        c = c + gate * (u_i - c)            # == (1 - gate) * c + gate * u
        o_ref[i] = c.astype(o_ref.dtype)    # (Tt, TB, D) block, leading-dim store

    c_ref[...] = c


def _sru_no_feedback_kernel(f_ref, u_ref, o_ref, c_ref):
    t = pl.program_id(1)

    @pl.when(t == 0)
    def _():
        c_ref[...] = jnp.zeros_like(c_ref)

    tb, n_sub, d = f_ref.shape
    c = c_ref[...]

    # feedback=False is an associative linear scan, but this kernel is
    # HBM-bound and each sub-step already has TB*D independent lanes, so the
    # serial chain is hidden; a parallel-scan rewrite is not worth the extra
    # traffic (per perf review).
    for i in range(n_sub):
        gate = jax.nn.sigmoid(f_ref[:, i, :].astype(jnp.float32))
        u_i = u_ref[:, i, :].astype(jnp.float32)
        c = c + gate * (u_i - c)
        o_ref[i] = c.astype(o_ref.dtype)

    c_ref[...] = c


# ------------------------------------------------------------ block sizing --

def _round_up(x, m):
    return -(-x // m) * m


def _num_tensorcores():
    """2 on v7x (two TensorCores per chip), 1 on v5e/v6e."""
    try:
        kind = jax.devices()[0].device_kind.lower()
    except Exception:
        return 1
    return 2 if ("v7" in kind or "7x" in kind) else 1


def _vmem_budget():
    """(byte budget for the double-buffered f/u/out tiles, vmem_limit cap)."""
    try:
        kind = jax.devices()[0].device_kind.lower()
    except Exception:
        kind = ""
    if "v7" in kind or "7x" in kind:
        return 16 * 2**20, 48 * 2**20      # 64 MiB physical VMEM per TC
    return 32 * 2**20, 96 * 2**20          # 128 MiB physical on v5e/v6e


def _choose_batch_block(batch):
    """Split the batch only when there is a second TensorCore to feed (v7x);
    on single-TC chips a split just doubles grid steps with half-size DMAs."""
    if _num_tensorcores() > 1 and batch % 16 == 0:
        return batch // 2
    return batch


# ---------------------------------------------------------------- wrapper ---

def sru_rnn_gate(f, u, w_fc=None, *, feedback=True, time_block=64):
    """f, u: (batch, length, dim). Returns (length, batch, dim) stacked cell
    states, matching the PyTorch module's torch.stack(cs, dim=0)."""
    B, L, D = f.shape
    assert u.shape == (B, L, D)
    out_dtype = f.dtype
    itemsize = jnp.dtype(f.dtype).itemsize

    # Lane-dense last dim: pad D to a multiple of 128 (zero-padded lanes stay
    # zero through the recurrence and are sliced off at the end).
    D_pad = _round_up(D, 128)

    TB = _choose_batch_block(B)

    # Time block from the VMEM budget: double-buffered f/u/out blocks dominate
    # (~ 2 bufs * 3 arrays * TB * Tt * D bytes).  Cap at `time_block` (also
    # bounds the statically-unrolled code size) and at the padded length.
    block_budget, vmem_cap = _vmem_budget()
    per_t = 2 * 3 * TB * D_pad * itemsize
    tt = block_budget // max(per_t, 1)
    tt = min(int(tt), int(time_block), _round_up(L, 8))
    Tt = max(8, (tt // 8) * 8)
    L_pad = _round_up(L, Tt)

    if (L_pad, D_pad) != (L, D):
        pad = ((0, 0), (0, L_pad - L), (0, D_pad - D))
        f = jnp.pad(f, pad)
        u = jnp.pad(u, pad)

    grid = (B // TB, L_pad // Tt)
    in_spec = pl.BlockSpec((TB, Tt, D_pad), lambda b, t: (b, t, 0))   # batch-major reads
    out_spec = pl.BlockSpec((Tt, TB, D_pad), lambda b, t: (t, b, 0))  # writes (L, B, D) directly
    scratch = [pltpu.VMEM((TB, D_pad), jnp.float32)]                  # carry c

    est_vmem = per_t * Tt + 3 * TB * D_pad * 4 + 2 * D_pad * 4
    cparams = pltpu.CompilerParams(
        dimension_semantics=("parallel", "arbitrary"),
        vmem_limit_bytes=int(min(vmem_cap, max(32 * 2**20, est_vmem + 8 * 2**20))),
    )
    out_shape = jax.ShapeDtypeStruct((L_pad, B, D_pad), out_dtype)

    if feedback:
        assert w_fc is not None and w_fc.shape == (D,)
        # Tiny (1, D) block; broadcast to (TB, D) once per grid step in-kernel.
        w_in = jnp.pad(w_fc.astype(jnp.float32), (0, D_pad - D)).reshape(1, D_pad)
        out = pl.pallas_call(
            _sru_feedback_kernel,
            out_shape=out_shape,
            grid_spec=pltpu.PrefetchScalarGridSpec(
                num_scalar_prefetch=0,
                grid=grid,
                in_specs=[
                    pl.BlockSpec((1, D_pad), lambda b, t: (0, 0)),    # W_fc (resident)
                    in_spec,                                          # f
                    in_spec,                                          # u
                ],
                out_specs=out_spec,
                scratch_shapes=scratch,
            ),
            compiler_params=cparams,
        )(w_in, f, u)
    else:
        out = pl.pallas_call(
            _sru_no_feedback_kernel,
            out_shape=out_shape,
            grid_spec=pltpu.PrefetchScalarGridSpec(
                num_scalar_prefetch=0,
                grid=grid,
                in_specs=[in_spec, in_spec],
                out_specs=out_spec,
                scratch_shapes=scratch,
            ),
            compiler_params=cparams,
        )(f, u)

    if (L_pad, D_pad) != (L, D):
        out = out[:L, :, :D]
    return out


# -------------------------------------------------------------- reference ---

def _reference(f, u, w_fc, feedback=True):
    """Pure-JAX reference mirroring the PyTorch forward."""
    B, L, D = f.shape
    if not feedback:
        f = jax.nn.sigmoid(f)
    c0 = jnp.zeros((B, D), jnp.float32)

    def step(c, inputs):
        f_, u_ = inputs
        if feedback:
            f_ = jax.nn.sigmoid(f_ + w_fc * c)
        c = (1.0 - f_) * c + f_ * u_
        return c, c

    _, cs = lax.scan(step, c0, (jnp.transpose(f, (1, 0, 2)),
                                jnp.transpose(u, (1, 0, 2))))
    return cs  # (L, B, D)


if __name__ == "__main__":
    key = jax.random.PRNGKey(0)

    # --- Test 1: module-default small shapes (exercises D padding 32 -> 128).
    d_model, batch, length = 32, 2, 8
    k_w, k_f, k_u, key = jax.random.split(key, 4)
    W_fc = jax.random.normal(k_w, (d_model,), dtype=jnp.float32)
    f = jax.random.normal(k_f, (batch, length, d_model), dtype=jnp.float32)
    u = jax.random.normal(k_u, (batch, length, d_model), dtype=jnp.float32)

    out = jax.block_until_ready(sru_rnn_gate(f, u, W_fc, feedback=True))
    ref = _reference(f, u, W_fc, feedback=True)
    assert out.shape == (length, batch, d_model)
    assert jnp.allclose(out, ref, atol=1e-5, rtol=1e-5), "feedback=True mismatch"

    out_nf = jax.block_until_ready(sru_rnn_gate(f, u, feedback=False))
    ref_nf = _reference(f, u, None, feedback=False)
    assert jnp.allclose(out_nf, ref_nf, atol=1e-5, rtol=1e-5), "feedback=False mismatch"

    # --- Test 2: multiple time blocks + time-tail padding (L=20, Tt=8) and
    #             a non-128 D (48 -> padded to 128), exercising the carry
    #             across grid steps and the output slicing.
    d_model2, batch2, length2 = 48, 4, 20
    k_w2, k_f2, k_u2, key = jax.random.split(key, 4)
    W_fc2 = jax.random.normal(k_w2, (d_model2,), dtype=jnp.float32)
    f2 = jax.random.normal(k_f2, (batch2, length2, d_model2), dtype=jnp.float32)
    u2 = jax.random.normal(k_u2, (batch2, length2, d_model2), dtype=jnp.float32)

    out2 = jax.block_until_ready(
        sru_rnn_gate(f2, u2, W_fc2, feedback=True, time_block=8))
    ref2 = _reference(f2, u2, W_fc2, feedback=True)
    assert out2.shape == (length2, batch2, d_model2)
    assert jnp.allclose(out2, ref2, atol=1e-5, rtol=1e-5), "multi-block mismatch"

    print("KERNEL_OK")
</pallas_src>

<mosaic_0001>
module attributes {stable_mosaic.version = 11 : i64} {
  func.func @_sru_feedback_kernel(%arg0: i32, %arg1: i32, %arg2: memref<1x128xf32, #tpu.memory_space<vmem>>, %arg3: memref<2x8x128xf32, #tpu.memory_space<vmem>>, %arg4: memref<2x8x128xf32, #tpu.memory_space<vmem>>, %arg5: memref<8x2x128xf32, #tpu.memory_space<vmem>>, %arg6: memref<2x128xf32, #tpu.memory_space<vmem>>) attributes {dimension_semantics = [#tpu.dimension_semantics<parallel>, #tpu.dimension_semantics<arbitrary>], iteration_bounds = array<i64: 1, 1>, scalar_prefetch = 0 : i64, scratch_operands = 1 : i64, tpu.core_type = #tpu.core_type<tc>, window_params = [{pipeline_mode = #tpu.pipeline_mode<synchronous>, transform_indices = @transform_0, window_bounds = array<i64: 1, 128>}, {transform_indices = @transform_1, window_bounds = array<i64: 2, 8, 128>}, {transform_indices = @transform_2, window_bounds = array<i64: 2, 8, 128>}, {transform_indices = @transform_3, window_bounds = array<i64: 8, 2, 128>}]} {
    %c0_i32 = arith.constant 0 : i32
    %0 = arith.cmpi eq, %arg1, %c0_i32 : i32
    %1 = arith.extui %0 : i1 to i32
    %c0_i32_0 = arith.constant 0 : i32
    %2 = arith.cmpi ne, %1, %c0_i32_0 : i32
    scf.if %2 {
      %cst_78 = arith.constant 0.000000e+00 : f32
      %144 = vector.broadcast %cst_78 : f32 to vector<2x128xf32>
      %c0_79 = arith.constant 0 : index
      %c0_80 = arith.constant 0 : index
      %145 = vector.load %arg6[%c0_79, %c0_80] : memref<2x128xf32, #tpu.memory_space<vmem>>, vector<2x128xf32>
      tpu.vector_store %arg6[%c0_79, %c0_80], %144 {strides = array<i32>} : memref<2x128xf32, #tpu.memory_space<vmem>>, vector<2x128xf32>,
    } else {
    }
    %c0 = arith.constant 0 : index
    %c0_1 = arith.constant 0 : index
    %3 = vector.load %arg2[%c0, %c0_1] : memref<1x128xf32, #tpu.memory_space<vmem>>, vector<1x128xf32>
    %4 = vector.shape_cast %3 : vector<1x128xf32> to vector<1x128xf32>
    %5 = vector.broadcast %4 : vector<1x128xf32> to vector<2x128xf32>
    %c0_2 = arith.constant 0 : index
    %c0_3 = arith.constant 0 : index
    %6 = vector.load %arg6[%c0_2, %c0_3] : memref<2x128xf32, #tpu.memory_space<vmem>>, vector<2x128xf32>
    %c0_4 = arith.constant 0 : index
    %c0_5 = arith.constant 0 : index
    %c0_6 = arith.constant 0 : index
    %7 = vector.load %arg3[%c0_4, %c0_5, %c0_6] : memref<2x8x128xf32, #tpu.memory_space<vmem>>, vector<2x1x128xf32>
    %8 = vector.shape_cast %7 : vector<2x1x128xf32> to vector<2x128xf32>
    %c0_7 = arith.constant 0 : index
    %c0_8 = arith.constant 0 : index
    %c0_9 = arith.constant 0 : index
    %9 = vector.load %arg4[%c0_7, %c0_8, %c0_9] : memref<2x8x128xf32, #tpu.memory_space<vmem>>, vector<2x1x128xf32>
    %10 = vector.shape_cast %9 : vector<2x1x128xf32> to vector<2x128xf32>
    %11 = arith.mulf %5, %6 : vector<2x128xf32>
    %12 = arith.addf %8, %11 : vector<2x128xf32>
    %13 = arith.negf %12 : vector<2x128xf32>
    %14 = math.exp %13 : vector<2x128xf32>
    %cst = arith.constant 1.000000e+00 : f32
    %15 = vector.broadcast %cst : f32 to vector<2x128xf32>
    %16 = arith.addf %15, %14 : vector<2x128xf32>
    %17 = arith.divf %15, %16 : vector<2x128xf32>
    %18 = arith.subf %10, %6 : vector<2x128xf32>
    %19 = arith.mulf %17, %18 : vector<2x128xf32>
    %20 = arith.addf %6, %19 : vector<2x128xf32>
    %c0_10 = arith.constant 0 : index
    %c0_11 = arith.constant 0 : index
    %c0_12 = arith.constant 0 : index
    %21 = vector.load %arg5[%c0_10, %c0_11, %c0_12] : memref<8x2x128xf32, #tpu.memory_space<vmem>>, vector<1x2x128xf32>
    %22 = vector.shape_cast %21 : vector<1x2x128xf32> to vector<2x128xf32>
    %23 = vector.shape_cast %20 : vector<2x128xf32> to vector<1x2x128xf32>
    tpu.vector_store %arg5[%c0_10, %c0_11, %c0_12], %23 {strides = array<i32>} : memref<8x2x128xf32, #tpu.memory_space<vmem>>, vector<1x2x128xf32>,
    %c0_13 = arith.constant 0 : index
    %c1 = arith.constant 1 : index
    %c0_14 = arith.constant 0 : index
    %24 = vector.load %arg3[%c0_13, %c1, %c0_14] : memref<2x8x128xf32, #tpu.memory_space<vmem>>, vector<2x1x128xf32>
    %25 = vector.shape_cast %24 : vector<2x1x128xf32> to vector<2x128xf32>
    %c0_15 = arith.constant 0 : index
    %c1_16 = arith.constant 1 : index
    %c0_17 = arith.constant 0 : index
    %26 = vector.load %arg4[%c0_15, %c1_16, %c0_17] : memref<2x8x128xf32, #tpu.memory_space<vmem>>, vector<2x1x128xf32>
    %27 = vector.shape_cast %26 : vector<2x1x128xf32> to vector<2x128xf32>
    %28 = arith.mulf %5, %20 : vector<2x128xf32>
    %29 = arith.addf %25, %28 : vector<2x128xf32>
    %30 = arith.negf %29 : vector<2x128xf32>
    %31 = math.exp %30 : vector<2x128xf32>
    %cst_18 = arith.constant 1.000000e+00 : f32
    %32 = vector.broadcast %cst_18 : f32 to vector<2x128xf32>
    %33 = arith.addf %32, %31 : vector<2x128xf32>
    %34 = arith.divf %32, %33 : vector<2x128xf32>
    %35 = arith.subf %27, %20 : vector<2x128xf32>
    %36 = arith.mulf %34, %35 : vector<2x128xf32>
    %37 = arith.addf %20, %36 : vector<2x128xf32>
    %c1_19 = arith.constant 1 : index
    %c0_20 = arith.constant 0 : index
    %c0_21 = arith.constant 0 : index
    %38 = vector.load %arg5[%c1_19, %c0_20, %c0_21] : memref<8x2x128xf32, #tpu.memory_space<vmem>>, vector<1x2x128xf32>
    %39 = vector.shape_cast %38 : vector<1x2x128xf32> to vector<2x128xf32>
    %40 = vector.shape_cast %37 : vector<2x128xf32> to vector<1x2x128xf32>
    tpu.vector_store %arg5[%c1_19, %c0_20, %c0_21], %40 {strides = array<i32>} : memref<8x2x128xf32, #tpu.memory_space<vmem>>, vector<1x2x128xf32>,
    %c0_22 = arith.constant 0 : index
    %c2 = arith.constant 2 : index
    %c0_23 = arith.constant 0 : index
    %41 = vector.load %arg3[%c0_22, %c2, %c0_23] : memref<2x8x128xf32, #tpu.memory_space<vmem>>, vector<2x1x128xf32>
    %42 = vector.shape_cast %41 : vector<2x1x128xf32> to vector<2x128xf32>
    %c0_24 = arith.constant 0 : index
    %c2_25 = arith.constant 2 : index
    %c0_26 = arith.constant 0 : index
    %43 = vector.load %arg4[%c0_24, %c2_25, %c0_26] : memref<2x8x128xf32, #tpu.memory_space<vmem>>, vector<2x1x128xf32>
    %44 = vector.shape_cast %43 : vector<2x1x128xf32> to vector<2x128xf32>
    %45 = arith.mulf %5, %37 : vector<2x128xf32>
    %46 = arith.addf %42, %45 : vector<2x128xf32>
    %47 = arith.negf %46 : vector<2x128xf32>
    %48 = math.exp %47 : vector<2x128xf32>
    %cst_27 = arith.constant 1.000000e+00 : f32
    %49 = vector.broadcast %cst_27 : f32 to vector<2x128xf32>
    %50 = arith.addf %49, %48 : vector<2x128xf32>
    %51 = arith.divf %49, %50 : vector<2x128xf32>
    %52 = arith.subf %44, %37 : vector<2x128xf32>
    %53 = arith.mulf %51, %52 : vector<2x128xf32>
    %54 = arith.addf %37, %53 : vector<2x128xf32>
    %c2_28 = arith.constant 2 : index
    %c0_29 = arith.constant 0 : index
    %c0_30 = arith.constant 0 : index
    %55 = vector.load %arg5[%c2_28, %c0_29, %c0_30] : memref<8x2x128xf32, #tpu.memory_space<vmem>>, vector<1x2x128xf32>
    %56 = vector.shape_cast %55 : vector<1x2x128xf32> to vector<2x128xf32>
    %57 = vector.shape_cast %54 : vector<2x128xf32> to vector<1x2x128xf32>
    tpu.vector_store %arg5[%c2_28, %c0_29, %c0_30], %57 {strides = array<i32>} : memref<8x2x128xf32, #tpu.memory_space<vmem>>, vector<1x2x128xf32>,
    %c0_31 = arith.constant 0 : index
    %c3 = arith.constant 3 : index
    %c0_32 = arith.constant 0 : index
    %58 = vector.load %arg3[%c0_31, %c3, %c0_32] : memref<2x8x128xf32, #tpu.memory_space<vmem>>, vector<2x1x128xf32>
    %59 = vector.shape_cast %58 : vector<2x1x128xf32> to vector<2x128xf32>
    %c0_33 = arith.constant 0 : index
    %c3_34 = arith.constant 3 : index
    %c0_35 = arith.constant 0 : index
    %60 = vector.load %arg4[%c0_33, %c3_34, %c0_35] : memref<2x8x128xf32, #tpu.memory_space<vmem>>, vector<2x1x128xf32>
    %61 = vector.shape_cast %60 : vector<2x1x128xf32> to vector<2x128xf32>
    %62 = arith.mulf %5, %54 : vector<2x128xf32>
    %63 = arith.addf %59, %62 : vector<2x128xf32>
    %64 = arith.negf %63 : vector<2x128xf32>
    %65 = math.exp %64 : vector<2x128xf32>
    %cst_36 = arith.constant 1.000000e+00 : f32
    %66 = vector.broadcast %cst_36 : f32 to vector<2x128xf32>
    %67 = arith.addf %66, %65 : vector<2x128xf32>
    %68 = arith.divf %66, %67 : vector<2x128xf32>
    %69 = arith.subf %61, %54 : vector<2x128xf32>
    %70 = arith.mulf %68, %69 : vector<2x128xf32>
    %71 = arith.addf %54, %70 : vector<2x128xf32>
    %c3_37 = arith.constant 3 : index
    %c0_38 = arith.constant 0 : index
    %c0_39 = arith.constant 0 : index
    %72 = vector.load %arg5[%c3_37, %c0_38, %c0_39] : memref<8x2x128xf32, #tpu.memory_space<vmem>>, vector<1x2x128xf32>
    %73 = vector.shape_cast %72 : vector<1x2x128xf32> to vector<2x128xf32>
    %74 = vector.shape_cast %71 : vector<2x128xf32> to vector<1x2x128xf32>
    tpu.vector_store %arg5[%c3_37, %c0_38, %c0_39], %74 {strides = array<i32>} : memref<8x2x128xf32, #tpu.memory_space<vmem>>, vector<1x2x128xf32>,
    %c0_40 = arith.constant 0 : index
    %c4 = arith.constant 4 : index
    %c0_41 = arith.constant 0 : index
    %75 = vector.load %arg3[%c0_40, %c4, %c0_41] : memref<2x8x128xf32, #tpu.memory_space<vmem>>, vector<2x1x128xf32>
    %76 = vector.shape_cast %75 : vector<2x1x128xf32> to vector<2x128xf32>
    %c0_42 = arith.constant 0 : index
    %c4_43 = arith.constant 4 : index
    %c0_44 = arith.constant 0 : index
    %77 = vector.load %arg4[%c0_42, %c4_43, %c0_44] : memref<2x8x128xf32, #tpu.memory_space<vmem>>, vector<2x1x128xf32>
    %78 = vector.shape_cast %77 : vector<2x1x128xf32> to vector<2x128xf32>
    %79 = arith.mulf %5, %71 : vector<2x128xf32>
    %80 = arith.addf %76, %79 : vector<2x128xf32>
    %81 = arith.negf %80 : vector<2x128xf32>
    %82 = math.exp %81 : vector<2x128xf32>
    %cst_45 = arith.constant 1.000000e+00 : f32
    %83 = vector.broadcast %cst_45 : f32 to vector<2x128xf32>
    %84 = arith.addf %83, %82 : vector<2x128xf32>
    %85 = arith.divf %83, %84 : vector<2x128xf32>
    %86 = arith.subf %78, %71 : vector<2x128xf32>
    %87 = arith.mulf %85, %86 : vector<2x128xf32>
    %88 = arith.addf %71, %87 : vector<2x128xf32>
    %c4_46 = arith.constant 4 : index
    %c0_47 = arith.constant 0 : index
    %c0_48 = arith.constant 0 : index
    %89 = vector.load %arg5[%c4_46, %c0_47, %c0_48] : memref<8x2x128xf32, #tpu.memory_space<vmem>>, vector<1x2x128xf32>
    %90 = vector.shape_cast %89 : vector<1x2x128xf32> to vector<2x128xf32>
    %91 = vector.shape_cast %88 : vector<2x128xf32> to vector<1x2x128xf32>
    tpu.vector_store %arg5[%c4_46, %c0_47, %c0_48], %91 {strides = array<i32>} : memref<8x2x128xf32, #tpu.memory_space<vmem>>, vector<1x2x128xf32>,
    %c0_49 = arith.constant 0 : index
    %c5 = arith.constant 5 : index
    %c0_50 = arith.constant 0 : index
    %92 = vector.load %arg3[%c0_49, %c5, %c0_50] : memref<2x8x128xf32, #tpu.memory_space<vmem>>, vector<2x1x128xf32>
    %93 = vector.shape_cast %92 : vector<2x1x128xf32> to vector<2x128xf32>
    %c0_51 = arith.constant 0 : index
    %c5_52 = arith.constant 5 : index
    %c0_53 = arith.constant 0 : index
    %94 = vector.load %arg4[%c0_51, %c5_52, %c0_53] : memref<2x8x128xf32, #tpu.memory_space<vmem>>, vector<2x1x128xf32>
    %95 = vector.shape_cast %94 : vector<2x1x128xf32> to vector<2x128xf32>
    %96 = arith.mulf %5, %88 : vector<2x128xf32>
    %97 = arith.addf %93, %96 : vector<2x128xf32>
    %98 = arith.negf %97 : vector<2x128xf32>
    %99 = math.exp %98 : vector<2x128xf32>
    %cst_54 = arith.constant 1.000000e+00 : f32
    %100 = vector.broadcast %cst_54 : f32 to vector<2x128xf32>
    %101 = arith.addf %100, %99 : vector<2x128xf32>
    %102 = arith.divf %100, %101 : vector<2x128xf32>
    %103 = arith.subf %95, %88 : vector<2x128xf32>
    %104 = arith.mulf %102, %103 : vector<2x128xf32>
    %105 = arith.addf %88, %104 : vector<2x128xf32>
    %c5_55 = arith.constant 5 : index
    %c0_56 = arith.constant 0 : index
    %c0_57 = arith.constant 0 : index
    %106 = vector.load %arg5[%c5_55, %c0_56, %c0_57] : memref<8x2x128xf32, #tpu.memory_space<vmem>>, vector<1x2x128xf32>
    %107 = vector.shape_cast %106 : vector<1x2x128xf32> to vector<2x128xf32>
    %108 = vector.shape_cast %105 : vector<2x128xf32> to vector<1x2x128xf32>
    tpu.vector_store %arg5[%c5_55, %c0_56, %c0_57], %108 {strides = array<i32>} : memref<8x2x128xf32, #tpu.memory_space<vmem>>, vector<1x2x128xf32>,
    %c0_58 = arith.constant 0 : index
    %c6 = arith.constant 6 : index
    %c0_59 = arith.constant 0 : index
    %109 = vector.load %arg3[%c0_58, %c6, %c0_59] : memref<2x8x128xf32, #tpu.memory_space<vmem>>, vector<2x1x128xf32>
    %110 = vector.shape_cast %109 : vector<2x1x128xf32> to vector<2x128xf32>
    %c0_60 = arith.constant 0 : index
    %c6_61 = arith.constant 6 : index
    %c0_62 = arith.constant 0 : index
    %111 = vector.load %arg4[%c0_60, %c6_61, %c0_62] : memref<2x8x128xf32, #tpu.memory_space<vmem>>, vector<2x1x128xf32>
    %112 = vector.shape_cast %111 : vector<2x1x128xf32> to vector<2x128xf32>
    %113 = arith.mulf %5, %105 : vector<2x128xf32>
    %114 = arith.addf %110, %113 : vector<2x128xf32>
    %115 = arith.negf %114 : vector<2x128xf32>
    %116 = math.exp %115 : vector<2x128xf32>
    %cst_63 = arith.constant 1.000000e+00 : f32
    %117 = vector.broadcast %cst_63 : f32 to vector<2x128xf32>
    %118 = arith.addf %117, %116 : vector<2x128xf32>
    %119 = arith.divf %117, %118 : vector<2x128xf32>
    %120 = arith.subf %112, %105 : vector<2x128xf32>
    %121 = arith.mulf %119, %120 : vector<2x128xf32>
    %122 = arith.addf %105, %121 : vector<2x128xf32>
    %c6_64 = arith.constant 6 : index
    %c0_65 = arith.constant 0 : index
    %c0_66 = arith.constant 0 : index
    %123 = vector.load %arg5[%c6_64, %c0_65, %c0_66] : memref<8x2x128xf32, #tpu.memory_space<vmem>>, vector<1x2x128xf32>
    %124 = vector.shape_cast %123 : vector<1x2x128xf32> to vector<2x128xf32>
    %125 = vector.shape_cast %122 : vector<2x128xf32> to vector<1x2x128xf32>
    tpu.vector_store %arg5[%c6_64, %c0_65, %c0_66], %125 {strides = array<i32>} : memref<8x2x128xf32, #tpu.memory_space<vmem>>, vector<1x2x128xf32>,
    %c0_67 = arith.constant 0 : index
    %c7 = arith.constant 7 : index
    %c0_68 = arith.constant 0 : index
    %126 = vector.load %arg3[%c0_67, %c7, %c0_68] : memref<2x8x128xf32, #tpu.memory_space<vmem>>, vector<2x1x128xf32>
    %127 = vector.shape_cast %126 : vector<2x1x128xf32> to vector<2x128xf32>
    %c0_69 = arith.constant 0 : index
    %c7_70 = arith.constant 7 : index
    %c0_71 = arith.constant 0 : index
    %128 = vector.load %arg4[%c0_69, %c7_70, %c0_71] : memref<2x8x128xf32, #tpu.memory_space<vmem>>, vector<2x1x128xf32>
    %129 = vector.shape_cast %128 : vector<2x1x128xf32> to vector<2x128xf32>
    %130 = arith.mulf %5, %122 : vector<2x128xf32>
    %131 = arith.addf %127, %130 : vector<2x128xf32>
    %132 = arith.negf %131 : vector<2x128xf32>
    %133 = math.exp %132 : vector<2x128xf32>
    %cst_72 = arith.constant 1.000000e+00 : f32
    %134 = vector.broadcast %cst_72 : f32 to vector<2x128xf32>
    %135 = arith.addf %134, %133 : vector<2x128xf32>
    %136 = arith.divf %134, %135 : vector<2x128xf32>
    %137 = arith.subf %129, %122 : vector<2x128xf32>
    %138 = arith.mulf %136, %137 : vector<2x128xf32>
    %139 = arith.addf %122, %138 : vector<2x128xf32>
    %c7_73 = arith.constant 7 : index
    %c0_74 = arith.constant 0 : index
    %c0_75 = arith.constant 0 : index
    %140 = vector.load %arg5[%c7_73, %c0_74, %c0_75] : memref<8x2x128xf32, #tpu.memory_space<vmem>>, vector<1x2x128xf32>
    %141 = vector.shape_cast %140 : vector<1x2x128xf32> to vector<2x128xf32>
    %142 = vector.shape_cast %139 : vector<2x128xf32> to vector<1x2x128xf32>
    tpu.vector_store %arg5[%c7_73, %c0_74, %c0_75], %142 {strides = array<i32>} : memref<8x2x128xf32, #tpu.memory_space<vmem>>, vector<1x2x128xf32>,
    %c0_76 = arith.constant 0 : index
    %c0_77 = arith.constant 0 : index
    %143 = vector.load %arg6[%c0_76, %c0_77] : memref<2x128xf32, #tpu.memory_space<vmem>>, vector<2x128xf32>
    tpu.vector_store %arg6[%c0_76, %c0_77], %139 {strides = array<i32>} : memref<2x128xf32, #tpu.memory_space<vmem>>, vector<2x128xf32>,
    return
  }
  func.func @transform_0(%arg0: i32, %arg1: i32) -> (i32, i32) {
    %c0_i32 = arith.constant 0 : i32
    %c0_i32_0 = arith.constant 0 : i32
    %c0_i32_1 = arith.constant 0 : i32
    return %c0_i32, %c0_i32_0 : i32, i32
  }
  func.func @transform_1(%arg0: i32, %arg1: i32) -> (i32, i32, i32) {
    %c0_i32 = arith.constant 0 : i32
    %c0_i32_0 = arith.constant 0 : i32
    return %arg0, %arg1, %c0_i32 : i32, i32, i32
  }
  func.func @transform_2(%arg0: i32, %arg1: i32) -> (i32, i32, i32) {
    %c0_i32 = arith.constant 0 : i32
    %c0_i32_0 = arith.constant 0 : i32
    return %arg0, %arg1, %c0_i32 : i32, i32, i32
  }
  func.func @transform_3(%arg0: i32, %arg1: i32) -> (i32, i32, i32) {
    %c0_i32 = arith.constant 0 : i32
    %c0_i32_0 = arith.constant 0 : i32
    return %arg1, %arg0, %c0_i32 : i32, i32, i32
  }
}

</mosaic_0001>

<llo_original>
// kernel: tpu_custom_call.1
$region0: #{tpu_custom_call.1}
  #allocation0 [shape = 'u32[]', space=smem, size = 0x4, offset = 0x4, fixed_abs, tag = 'smem constant byte address 0x4 - core index']
  #allocation1 [shape = 'u32[144,128]{1,0:T(1,128)}', space=vmem, size = 0x12000, scoped, tag = 'internal scratch']
  #allocation2 [shape = 'f32[2,128]{1,0:T(2,128)}', space=vmem, size = 0x400, scoped, tag = 'scratch operand']
  %s0 = inlined_call_operand.hbm [shape: f32[1,128], index: 0, kind: input, shape index: {}]
  %s1 = inlined_call_operand.hbm [shape: f32[2,8,128], index: 1, kind: input, shape index: {}]
  %s2 = inlined_call_operand.hbm [shape: f32[2,8,128], index: 2, kind: input, shape index: {}]
  %s3 = inlined_call_operand.hbm [shape: f32[8,2,128], index: 3, kind: output, shape index: {}]
  %s4 = sld [smem:[#allocation0]]
  $region38: #{tpu_custom_call.1} parent=0
    _
  %s6 = ssub.s32 1, %s4
  %s7 = scalar_select 0, %s6, %s4
  $region1: #{tpu_custom_call.1} parent=0
    #allocation3 [shape = 'u8[512]{0}', space=vmem, size = 0x400, scoped, tag = 'input window, operand 0, single buffered']
    #allocation4 [shape = 's32[1]{0}', space=sflag, size = 0x4, scoped, tag = 'scoped memory for tpu_custom_call.1']
    #allocation5 [shape = 's32[1]{0}', space=sflag, size = 0x4, scoped, tag = 'scoped memory for tpu_custom_call.1']
    #allocation6 [shape = 'u8[8192]{0}', space=vmem, size = 0x2000, scoped, tag = 'input window, operand 1, single buffered']
    #allocation7 [shape = 's32[1]{0}', space=sflag, size = 0x4, scoped, tag = 'scoped memory for tpu_custom_call.1']
    #allocation8 [shape = 'u8[8192]{0}', space=vmem, size = 0x2000, scoped, tag = 'input window, operand 2, single buffered']
    #allocation9 [shape = 'u8[8192]{0}', space=vmem, size = 0x2000, scoped, tag = 'output window, operand 0, single buffered']
    %8 = vsyncpa [#allocation4], 0
    %9 = vsyncpa [#allocation7], 0
    %10 = vsyncpa [#allocation5], 0
    // Predicated region
    $region2: #{tpu_custom_call.1} parent=1 // pred_check
      _
    $region3: #{tpu_custom_call.1} parent=1 // pred_check_branch
      %12 = sbr.rel (0) target = $region5
    $region4: #{tpu_custom_call.1} parent=1 // pred_region
      %s14 = ssub.s32 16, 16
      %15 = vsyncadd [#allocation4], %s14
      %s17 = sshll.u32 [#allocation3], 4
      %s18 = int_to_ptr.vmem [resolvable:$true] %s17
      %20 = dma.hbm_to_vmem [thread:$0]  %s0, 16, %s18, [#allocation4]
    $region5: #{tpu_custom_call.1} parent=1 // pred_fallthru
      _
    // Predicated region
    $region6: #{tpu_custom_call.1} parent=1 // pred_check
      _
    $region7: #{tpu_custom_call.1} parent=1 // pred_check_branch
      %22 = sbr.rel (0) target = $region9
    $region8: #{tpu_custom_call.1} parent=1 // pred_region
      %s24 = ssub.s32 256, 256
      %25 = vsyncadd [#allocation7], %s24
      %s26 = sshll.u32 [#allocation6], 4
      %s27 = int_to_ptr.vmem [resolvable:$true] %s26
      %32 = dma.hbm_to_vmem [thread:$0]  %s1, 256, %s27, [#allocation7], 128, 128, 8
    $region9: #{tpu_custom_call.1} parent=1 // pred_fallthru
      _
    // Predicated region
    $region10: #{tpu_custom_call.1} parent=1 // pred_check
      _
    $region11: #{tpu_custom_call.1} parent=1 // pred_check_branch
      %34 = sbr.rel (0) target = $region13
    $region12: #{tpu_custom_call.1} parent=1 // pred_region
      %s36 = ssub.s32 256, 256
      %37 = vsyncadd [#allocation7], %s36
      %s38 = sshll.u32 [#allocation8], 4
      %s39 = int_to_ptr.vmem [resolvable:$true] %s38
      %44 = dma.hbm_to_vmem [thread:$0]  %s2, 256, %s39, [#allocation7], 128, 128, 8
    $region13: #{tpu_custom_call.1} parent=1 // pred_fallthru
      _
    // Predicated region
    $region14: #{tpu_custom_call.1} parent=1 // pred_check
      _
    $region15: #{tpu_custom_call.1} parent=1 // pred_check_branch
      %46 = sbr.rel (0) target = $region17
    $region16: #{tpu_custom_call.1} parent=1 // pred_region
      %47 = dma.done [#allocation4], 16
    $region17: #{tpu_custom_call.1} parent=1 // pred_fallthru
      _
    // Predicated region
    $region18: #{tpu_custom_call.1} parent=1 // pred_check
      _
    $region19: #{tpu_custom_call.1} parent=1 // pred_check_branch
      %49 = sbr.rel (0) target = $region21
    $region20: #{tpu_custom_call.1} parent=1 // pred_region
      %50 = dma.done [#allocation7], 256
    $region21: #{tpu_custom_call.1} parent=1 // pred_fallthru
      _
    // Predicated region
    $region22: #{tpu_custom_call.1} parent=1 // pred_check
      _
    $region23: #{tpu_custom_call.1} parent=1 // pred_check_branch
      %52 = sbr.rel (0) target = $region25
    $region24: #{tpu_custom_call.1} parent=1 // pred_region
      %53 = dma.done [#allocation7], 256
    $region25: #{tpu_custom_call.1} parent=1 // pred_fallthru
      _
    %p54 = scmp.eq.s32.totalorder 0, 0
    // Predicated region
    $region26: #{tpu_custom_call.1} parent=1 // pred_check
      %p55 = pneg %p54
    $region27: #{tpu_custom_call.1} parent=1 // pred_check_branch
      %57 = sbr.rel (%p55) target = $region29
    $region28: #{tpu_custom_call.1} parent=1 // pred_region
      %58 = vst [vmem:[#allocation2] sm:$0x3] 0.0
    $region29: #{tpu_custom_call.1} parent=1 // pred_fallthru
      _
    %v59 = vld [vmem:[#allocation3] sm:$0x1]
    %v61 = vlaneseq
    %v62 = vshrl.u32 %v61, 7
    %v63 = vsub.s32 0, %v62
    %v64 = vrot.slane %v59, %v63
    %v66 = vld [vmem:[#allocation2] sm:$0x3]
    %v67 = vld [vmem:[#allocation6] sm:$0x1]
    %v68 = vld [vmem:[#allocation6 + $0x8] sm:$0x1]
    %v69 = vld [vmem:[#allocation8] sm:$0x1]
    %v70 = vld [vmem:[#allocation8 + $0x8] sm:$0x1]
    %v71 = vmul.f32 %v64, %v66
    %v73 = vrot.slane %v71, 1
    %v76 = vadd.f32 %v67, %v71
    %v77 = vadd.f32 %v68, %v73
    %v78 = vxor.u32 %v76, 2147483648
    %v79 = vxor.u32 %v77, 2147483648
    %v80 = vmul.f32 %v78, 1.442695
    %v81 = vpow.pop %v80
    %v82 = vmul.f32 %v79, 1.442695
    %v83 = vpow.pop %v82
    %v84 = vadd.f32 %v81, 1.0
    %v85 = vadd.f32 %v83, 1.0
    %v86 = vrcp.pop %v84
    %v87 = vmul.f32 1.0, %v86
    %v88 = vrcp.pop %v85
    %v89 = vmul.f32 1.0, %v88
    %v91 = vrot.slane %v66, 1
    %v94 = vsub.f32 %v69, %v66
    %v95 = vsub.f32 %v70, %v91
    %v96 = vmul.f32 %v87, %v94
    %v97 = vmul.f32 %v89, %v95
    %v100 = vrot.slane %v97, 7
    %vm101 = vcmask 1041409
    %v102 = vsel %vm101, %v100, %v96
    %v104 = vadd.f32 %v66, %v102
    %105 = vst [vmem:[#allocation9] sm:$0x3] %v104
    %v106 = vld [vmem:[#allocation6 + $0x1] sm:$0x1]
    %v107 = vld [vmem:[#allocation6 + $0x9] sm:$0x1]
    %v108 = vld [vmem:[#allocation8 + $0x1] sm:$0x1]
    %v109 = vld [vmem:[#allocation8 + $0x9] sm:$0x1]
    %v110 = vmul.f32 %v64, %v104
    %v112 = vrot.slane %v110, 1
    %v115 = vadd.f32 %v106, %v110
    %v116 = vadd.f32 %v107, %v112
    %v117 = vxor.u32 %v115, 2147483648
    %v118 = vxor.u32 %v116, 2147483648
    %v119 = vmul.f32 %v117, 1.442695
    %v120 = vpow.pop %v119
    %v121 = vmul.f32 %v118, 1.442695
    %v122 = vpow.pop %v121
    %v123 = vadd.f32 %v120, 1.0
    %v124 = vadd.f32 %v122, 1.0
    %v125 = vrcp.pop %v123
    %v126 = vmul.f32 1.0, %v125
    %v127 = vrcp.pop %v124
    %v128 = vmul.f32 1.0, %v127
    %v130 = vrot.slane %v104, 1
    %v133 = vsub.f32 %v108, %v104
    %v134 = vsub.f32 %v109, %v130
    %v135 = vmul.f32 %v126, %v133
    %v136 = vmul.f32 %v128, %v134
    %v139 = vrot.slane %v136, 7
    %v140 = vsel %vm101, %v139, %v135
    %v142 = vadd.f32 %v104, %v140
    %s143 = scalar_lea.vmem [#allocation9], 2
    %144 = vst [vmem:[%s143] sm:$0x3] %v142
    %v145 = vld [vmem:[#allocation6 + $0x2] sm:$0x1]
    %v146 = vld [vmem:[#allocation6 + $0xa] sm:$0x1]
    %v147 = vld [vmem:[#allocation8 + $0x2] sm:$0x1]
    %v148 = vld [vmem:[#allocation8 + $0xa] sm:$0x1]
    %v149 = vmul.f32 %v64, %v142
    %v151 = vrot.slane %v149, 1
    %v154 = vadd.f32 %v145, %v149
    %v155 = vadd.f32 %v146, %v151
    %v156 = vxor.u32 %v154, 2147483648
    %v157 = vxor.u32 %v155, 2147483648
    %v158 = vmul.f32 %v156, 1.442695
    %v159 = vpow.pop %v158
    %v160 = vmul.f32 %v157, 1.442695
    %v161 = vpow.pop %v160
    %v162 = vadd.f32 %v159, 1.0
    %v163 = vadd.f32 %v161, 1.0
    %v164 = vrcp.pop %v162
    %v165 = vmul.f32 1.0, %v164
    %v166 = vrcp.pop %v163
    %v167 = vmul.f32 1.0, %v166
    %v169 = vrot.slane %v142, 1
    %v172 = vsub.f32 %v147, %v142
    %v173 = vsub.f32 %v148, %v169
    %v174 = vmul.f32 %v165, %v172
    %v175 = vmul.f32 %v167, %v173
    %v178 = vrot.slane %v175, 7
    %v179 = vsel %vm101, %v178, %v174
    %v181 = vadd.f32 %v142, %v179
    %s182 = scalar_lea.vmem [#allocation9], 4
    %183 = vst [vmem:[%s182] sm:$0x3] %v181
    %v184 = vld [vmem:[#allocation6 + $0x3] sm:$0x1]
    %v185 = vld [vmem:[#allocation6 + $0xb] sm:$0x1]
    %v186 = vld [vmem:[#allocation8 + $0x3] sm:$0x1]
    %v187 = vld [vmem:[#allocation8 + $0xb] sm:$0x1]
    %v188 = vmul.f32 %v64, %v181
    %v190 = vrot.slane %v188, 1
    %v193 = vadd.f32 %v184, %v188
    %v194 = vadd.f32 %v185, %v190
    %v195 = vxor.u32 %v193, 2147483648
    %v196 = vxor.u32 %v194, 2147483648
    %v197 = vmul.f32 %v195, 1.442695
    %v198 = vpow.pop %v197
    %v199 = vmul.f32 %v196, 1.442695
    %v200 = vpow.pop %v199
    %v201 = vadd.f32 %v198, 1.0
    %v202 = vadd.f32 %v200, 1.0
    %v203 = vrcp.pop %v201
    %v204 = vmul.f32 1.0, %v203
    %v205 = vrcp.pop %v202
    %v206 = vmul.f32 1.0, %v205
    %v208 = vrot.slane %v181, 1
    %v211 = vsub.f32 %v186, %v181
    %v212 = vsub.f32 %v187, %v208
    %v213 = vmul.f32 %v204, %v211
    %v214 = vmul.f32 %v206, %v212
    %v217 = vrot.slane %v214, 7
    %v218 = vsel %vm101, %v217, %v213
    %v220 = vadd.f32 %v181, %v218
    %s221 = scalar_lea.vmem [#allocation9], 6
    %222 = vst [vmem:[%s221] sm:$0x3] %v220
    %v223 = vld [vmem:[#allocation6 + $0x4] sm:$0x1]
    %v224 = vld [vmem:[#allocation6 + $0xc] sm:$0x1]
    %v225 = vld [vmem:[#allocation8 + $0x4] sm:$0x1]
    %v226 = vld [vmem:[#allocation8 + $0xc] sm:$0x1]
    %v227 = vmul.f32 %v64, %v220
    %v229 = vrot.slane %v227, 1
    %v232 = vadd.f32 %v223, %v227
    %v233 = vadd.f32 %v224, %v229
    %v234 = vxor.u32 %v232, 2147483648
    %v235 = vxor.u32 %v233, 2147483648
    %v236 = vmul.f32 %v234, 1.442695
    %v237 = vpow.pop %v236
    %v238 = vmul.f32 %v235, 1.442695
    %v239 = vpow.pop %v238
    %v240 = vadd.f32 %v237, 1.0
    %v241 = vadd.f32 %v239, 1.0
    %v242 = vrcp.pop %v240
    %v243 = vmul.f32 1.0, %v242
    %v244 = vrcp.pop %v241
    %v245 = vmul.f32 1.0, %v244
    %v247 = vrot.slane %v220, 1
    %v250 = vsub.f32 %v225, %v220
    %v251 = vsub.f32 %v226, %v247
    %v252 = vmul.f32 %v243, %v250
    %v253 = vmul.f32 %v245, %v251
    %v256 = vrot.slane %v253, 7
    %v257 = vsel %vm101, %v256, %v252
    %v259 = vadd.f32 %v220, %v257
    %s260 = scalar_lea.vmem [#allocation9], 8
    %261 = vst [vmem:[%s260] sm:$0x3] %v259
    %v262 = vld [vmem:[#allocation6 + $0x5] sm:$0x1]
    %v263 = vld [vmem:[#allocation6 + $0xd] sm:$0x1]
    %v264 = vld [vmem:[#allocation8 + $0x5] sm:$0x1]
    %v265 = vld [vmem:[#allocation8 + $0xd] sm:$0x1]
    %v266 = vmul.f32 %v64, %v259
    %v268 = vrot.slane %v266, 1
    %v271 = vadd.f32 %v262, %v266
    %v272 = vadd.f32 %v263, %v268
    %v273 = vxor.u32 %v271, 2147483648
    %v274 = vxor.u32 %v272, 2147483648
    %v275 = vmul.f32 %v273, 1.442695
    %v276 = vpow.pop %v275
    %v277 = vmul.f32 %v274, 1.442695
    %v278 = vpow.pop %v277
    %v279 = vadd.f32 %v276, 1.0
    %v280 = vadd.f32 %v278, 1.0
    %v281 = vrcp.pop %v279
    %v282 = vmul.f32 1.0, %v281
    %v283 = vrcp.pop %v280
    %v284 = vmul.f32 1.0, %v283
    %v286 = vrot.slane %v259, 1
    %v289 = vsub.f32 %v264, %v259
    %v290 = vsub.f32 %v265, %v286
    %v291 = vmul.f32 %v282, %v289
    %v292 = vmul.f32 %v284, %v290
    %v295 = vrot.slane %v292, 7
    %v296 = vsel %vm101, %v295, %v291
    %v298 = vadd.f32 %v259, %v296
    %s299 = scalar_lea.vmem [#allocation9], 10
    %300 = vst [vmem:[%s299] sm:$0x3] %v298
    %v301 = vld [vmem:[#allocation6 + $0x6] sm:$0x1]
    %v302 = vld [vmem:[#allocation6 + $0xe] sm:$0x1]
    %v303 = vld [vmem:[#allocation8 + $0x6] sm:$0x1]
    %v304 = vld [vmem:[#allocation8 + $0xe] sm:$0x1]
    %v305 = vmul.f32 %v64, %v298
    %v307 = vrot.slane %v305, 1
    %v310 = vadd.f32 %v301, %v305
    %v311 = vadd.f32 %v302, %v307
    %v312 = vxor.u32 %v310, 2147483648
    %v313 = vxor.u32 %v311, 2147483648
    %v314 = vmul.f32 %v312, 1.442695
    %v315 = vpow.pop %v314
    %v316 = vmul.f32 %v313, 1.442695
    %v317 = vpow.pop %v316
    %v318 = vadd.f32 %v315, 1.0
    %v319 = vadd.f32 %v317, 1.0
    %v320 = vrcp.pop %v318
    %v321 = vmul.f32 1.0, %v320
    %v322 = vrcp.pop %v319
    %v323 = vmul.f32 1.0, %v322
    %v325 = vrot.slane %v298, 1
    %v328 = vsub.f32 %v303, %v298
    %v329 = vsub.f32 %v304, %v325
    %v330 = vmul.f32 %v321, %v328
    %v331 = vmul.f32 %v323, %v329
    %v334 = vrot.slane %v331, 7
    %v335 = vsel %vm101, %v334, %v330
    %v337 = vadd.f32 %v298, %v335
    %s338 = scalar_lea.vmem [#allocation9], 12
    %339 = vst [vmem:[%s338] sm:$0x3] %v337
    %v340 = vld [vmem:[#allocation6 + $0x7] sm:$0x1]
    %v341 = vld [vmem:[#allocation6 + $0xf] sm:$0x1]
    %v342 = vld [vmem:[#allocation8 + $0x7] sm:$0x1]
    %v343 = vld [vmem:[#allocation8 + $0xf] sm:$0x1]
    %v344 = vmul.f32 %v64, %v337
    %v346 = vrot.slane %v344, 1
    %v349 = vadd.f32 %v340, %v344
    %v350 = vadd.f32 %v341, %v346
    %v351 = vxor.u32 %v349, 2147483648
    %v352 = vxor.u32 %v350, 2147483648
    %v353 = vmul.f32 %v351, 1.442695
    %v354 = vpow.pop %v353
    %v355 = vmul.f32 %v352, 1.442695
    %v356 = vpow.pop %v355
    %v357 = vadd.f32 %v354, 1.0
    %v358 = vadd.f32 %v356, 1.0
    %v359 = vrcp.pop %v357
    %v360 = vmul.f32 1.0, %v359
    %v361 = vrcp.pop %v358
    %v362 = vmul.f32 1.0, %v361
    %v364 = vrot.slane %v337, 1
    %v367 = vsub.f32 %v342, %v337
    %v368 = vsub.f32 %v343, %v364
    %v369 = vmul.f32 %v360, %v367
    %v370 = vmul.f32 %v362, %v368
    %v373 = vrot.slane %v370, 7
    %v374 = vsel %vm101, %v373, %v369
    %v376 = vadd.f32 %v337, %v374
    %s377 = scalar_lea.vmem [#allocation9], 14
    %378 = vst [vmem:[%s377] sm:$0x3] %v376
    %379 = vst [vmem:[#allocation2] sm:$0x3] %v376
    // Predicated region
    $region30: #{tpu_custom_call.1} parent=1 // pred_check
      _
    $region31: #{tpu_custom_call.1} parent=1 // pred_check_branch
      %381 = sbr.rel (0) target = $region33
    $region32: #{tpu_custom_call.1} parent=1 // pred_region
      %s383 = ssub.s32 256, 256
      %384 = vsyncadd [#allocation5], %s383
      %s385 = sshll.u32 [#allocation9], 4
      %s386 = int_to_ptr.vmem [resolvable:$true] %s385
      %391 = dma.vmem_to_hbm [thread:$0]  %s386, 256, %s3, [#allocation5], 32, 32, 2
    $region33: #{tpu_custom_call.1} parent=1 // pred_fallthru
      _
    // Predicated region
    $region34: #{tpu_custom_call.1} parent=1 // pred_check
      _
    $region35: #{tpu_custom_call.1} parent=1 // pred_check_branch
      %393 = sbr.rel (0) target = $region37
    $region36: #{tpu_custom_call.1} parent=1 // pred_region
      %394 = dma.done [#allocation5], 256
    $region37: #{tpu_custom_call.1} parent=1 // pred_fallthru
      _
    %395 = vsyncpa [#allocation4], 1
    %396 = vsyncpa [#allocation7], 1
    %397 = vsyncpa [#allocation5], 1

</llo_original>
